<compile_context>
chip_gen: v6e
topology: v6e:2x2x1
jax: 0.10.0
libtpu: 0.0.40
codegen_flags: <defaults>
</compile_context>

<pallas_src>
import functools

import jax
import jax.numpy as jnp
from jax.experimental import pallas as pl
from jax.experimental.pallas import tpu as pltpu


def _mlp_kernel(xt_ref, w1_ref, b1_ref, w2_ref, b2_ref, w3_ref, b3_ref, o_ref):
    xt = xt_ref[...]                                                   # (10, TB)
    # Layer 1: (20,10) @ (10,TB) + (20,1), ReLU.
    h1 = jnp.dot(w1_ref[...], xt, preferred_element_type=jnp.float32)  # (20, TB)
    h1 = jnp.maximum(h1 + b1_ref[...], 0.0)
    # Layer 2: (10,20) @ (20,TB) + (10,1), ReLU.
    h2 = jnp.dot(w2_ref[...], h1, preferred_element_type=jnp.float32)  # (10, TB)
    h2 = jnp.maximum(h2 + b2_ref[...], 0.0)
    # Layer 3 (out_features = 1): elementwise multiply + sublane reduce on the
    # XLU instead of pushing a 1-row result through the MXU.
    y = jnp.sum(w3_ref[...] * h2, axis=0, keepdims=True) + b3_ref[...]  # (1, TB)
    o_ref[...] = y.astype(o_ref.dtype)


def prepare_params(params):
    """Hoisted per-model param prep (reshapes done once, not per call)."""
    return {
        "w1": params["w1"],                      # (20, 10) — MXU LHS as stored
        "b1": params["b1"].reshape(20, 1),
        "w2": params["w2"],                      # (10, 20)
        "b2": params["b2"].reshape(10, 1),
        "w3c": params["w3"].reshape(10, 1),      # (1,10) -> column for the reduce
        "b3": params["b3"].reshape(1, 1),
    }


@functools.partial(jax.jit, static_argnames=("batch_tile",))
def prunable_nn_forward(x, prepared, *, batch_tile=8192):
    """x: (B, 10) float32.  prepared: output of prepare_params()."""
    B, F = x.shape
    assert F == 10, F

    if B <= batch_tile:
        tb, Bp = B, B                      # single step, block == full array
    else:
        tb = batch_tile                    # multiple of 128 -> lane-dense blocks
        Bp = pl.cdiv(B, tb) * tb
        if Bp != B:
            x = jnp.pad(x, ((0, Bp - B), (0, 0)))

    xt = x.T                               # (10, Bp): batch on the lane axis
    grid = (Bp // tb,)

    yt = pl.pallas_call(
        _mlp_kernel,
        out_shape=jax.ShapeDtypeStruct((1, Bp), jnp.float32),
        grid_spec=pltpu.PrefetchScalarGridSpec(
            num_scalar_prefetch=0,
            grid=grid,
            in_specs=[
                pl.BlockSpec((10, tb), lambda i: (0, i)),   # x^T tile (streamed)
                pl.BlockSpec((20, 10), lambda i: (0, 0)),   # w1 (VMEM-resident)
                pl.BlockSpec((20, 1), lambda i: (0, 0)),    # b1
                pl.BlockSpec((10, 20), lambda i: (0, 0)),   # w2
                pl.BlockSpec((10, 1), lambda i: (0, 0)),    # b2
                pl.BlockSpec((10, 1), lambda i: (0, 0)),    # w3 column
                pl.BlockSpec((1, 1), lambda i: (0, 0)),     # b3
            ],
            out_specs=pl.BlockSpec((1, tb), lambda i: (0, i)),
        ),
        compiler_params=pltpu.CompilerParams(
            dimension_semantics=("parallel",),   # megacore sharding on v7x
        ),
    )(xt, prepared["w1"], prepared["b1"], prepared["w2"], prepared["b2"],
      prepared["w3c"], prepared["b3"])

    return yt[:, :B].reshape(B, 1)


def init_params(key):
    """Deterministic init matching nn.Linear shapes (Kaiming-uniform-ish bounds)."""
    ks = jax.random.split(key, 6)

    def lin(kw, kb, out_f, in_f):
        bound = 1.0 / jnp.sqrt(in_f)
        w = jax.random.uniform(kw, (out_f, in_f), jnp.float32, -bound, bound)
        b = jax.random.uniform(kb, (out_f,), jnp.float32, -bound, bound)
        return w, b

    w1, b1 = lin(ks[0], ks[1], 20, 10)
    w2, b2 = lin(ks[2], ks[3], 10, 20)
    w3, b3 = lin(ks[4], ks[5], 1, 10)
    return {"w1": w1, "b1": b1, "w2": w2, "b2": b2, "w3": w3, "b3": b3}


def reference_forward(x, p):
    h1 = jnp.maximum(x @ p["w1"].T + p["b1"], 0.0)
    h2 = jnp.maximum(h1 @ p["w2"].T + p["b2"], 0.0)
    return h2 @ p["w3"].T + p["b3"]


if __name__ == "__main__":
    key = jax.random.PRNGKey(0)
    kx, kp, kx2 = jax.random.split(key, 3)
    params = init_params(kp)
    prepared = prepare_params(params)

    # Small-batch case (single grid step, block == full array).
    x = jax.random.normal(kx, (8, 10), jnp.float32)
    out = jax.block_until_ready(prunable_nn_forward(x, prepared))
    ref = reference_forward(x, params)
    assert out.shape == (8, 1), out.shape
    assert jnp.allclose(out, ref, atol=1e-5, rtol=1e-5), "mismatch vs reference (B=8)"

    # Exercise the batch-tiled / padded pipeline path (grid of 3 tiles of 128).
    x2 = jax.random.normal(kx2, (260, 10), jnp.float32)
    out2 = jax.block_until_ready(prunable_nn_forward(x2, prepared, batch_tile=128))
    ref2 = reference_forward(x2, params)
    assert out2.shape == (260, 1), out2.shape
    assert jnp.allclose(out2, ref2, atol=1e-5, rtol=1e-5), "mismatch vs reference (B=260)"

    print("KERNEL_OK")
</pallas_src>

<mosaic_0001>
module attributes {stable_mosaic.version = 11 : i64} {
  func.func @_mlp_kernel(%arg0: i32, %arg1: memref<10x8xf32, #tpu.memory_space<vmem>>, %arg2: memref<20x10xf32, #tpu.memory_space<vmem>>, %arg3: memref<20x1xf32, #tpu.memory_space<vmem>>, %arg4: memref<10x20xf32, #tpu.memory_space<vmem>>, %arg5: memref<10x1xf32, #tpu.memory_space<vmem>>, %arg6: memref<10x1xf32, #tpu.memory_space<vmem>>, %arg7: memref<1x1xf32, #tpu.memory_space<vmem>>, %arg8: memref<1x8xf32, #tpu.memory_space<vmem>>) attributes {dimension_semantics = [#tpu.dimension_semantics<parallel>], iteration_bounds = array<i64: 1>, scalar_prefetch = 0 : i64, scratch_operands = 0 : i64, tpu.core_type = #tpu.core_type<tc>, window_params = [{transform_indices = @transform_0, window_bounds = array<i64: 10, 8>}, {pipeline_mode = #tpu.pipeline_mode<synchronous>, transform_indices = @transform_1, window_bounds = array<i64: 20, 10>}, {pipeline_mode = #tpu.pipeline_mode<synchronous>, transform_indices = @transform_2, window_bounds = array<i64: 20, 1>}, {pipeline_mode = #tpu.pipeline_mode<synchronous>, transform_indices = @transform_3, window_bounds = array<i64: 10, 20>}, {pipeline_mode = #tpu.pipeline_mode<synchronous>, transform_indices = @transform_4, window_bounds = array<i64: 10, 1>}, {pipeline_mode = #tpu.pipeline_mode<synchronous>, transform_indices = @transform_5, window_bounds = array<i64: 10, 1>}, {pipeline_mode = #tpu.pipeline_mode<synchronous>, transform_indices = @transform_6, window_bounds = array<i64: 1, 1>}, {transform_indices = @transform_7, window_bounds = array<i64: 1, 8>}]} {
    %c0 = arith.constant 0 : index
    %c0_0 = arith.constant 0 : index
    %0 = vector.load %arg1[%c0, %c0_0] : memref<10x8xf32, #tpu.memory_space<vmem>>, vector<10x8xf32>
    %c0_1 = arith.constant 0 : index
    %c0_2 = arith.constant 0 : index
    %1 = vector.load %arg2[%c0_1, %c0_2] : memref<20x10xf32, #tpu.memory_space<vmem>>, vector<20x10xf32>
    %cst = arith.constant dense<0.000000e+00> : vector<20x8xf32>
    %2 = tpu.matmul %1, %0, %cst {dimension_numbers = #tpu.dot_dimension_numbers<[1], [0], [0], [1], [0, 0, 1, 1], [], []>} : vector<20x10xf32>, vector<10x8xf32>, vector<20x8xf32> -> vector<20x8xf32>
    %c0_3 = arith.constant 0 : index
    %c0_4 = arith.constant 0 : index
    %3 = vector.load %arg3[%c0_3, %c0_4] : memref<20x1xf32, #tpu.memory_space<vmem>>, vector<20x1xf32>
    %4 = vector.broadcast %3 : vector<20x1xf32> to vector<20x8xf32>
    %5 = arith.addf %2, %4 : vector<20x8xf32>
    %cst_5 = arith.constant 0.000000e+00 : f32
    %6 = vector.broadcast %cst_5 : f32 to vector<20x8xf32>
    %7 = arith.maximumf %5, %6 : vector<20x8xf32>
    %c0_6 = arith.constant 0 : index
    %c0_7 = arith.constant 0 : index
    %8 = vector.load %arg4[%c0_6, %c0_7] : memref<10x20xf32, #tpu.memory_space<vmem>>, vector<10x20xf32>
    %cst_8 = arith.constant dense<0.000000e+00> : vector<10x8xf32>
    %9 = tpu.matmul %8, %7, %cst_8 {dimension_numbers = #tpu.dot_dimension_numbers<[1], [0], [0], [1], [0, 0, 1, 1], [], []>} : vector<10x20xf32>, vector<20x8xf32>, vector<10x8xf32> -> vector<10x8xf32>
    %c0_9 = arith.constant 0 : index
    %c0_10 = arith.constant 0 : index
    %10 = vector.load %arg5[%c0_9, %c0_10] : memref<10x1xf32, #tpu.memory_space<vmem>>, vector<10x1xf32>
    %11 = vector.broadcast %10 : vector<10x1xf32> to vector<10x8xf32>
    %12 = arith.addf %9, %11 : vector<10x8xf32>
    %cst_11 = arith.constant 0.000000e+00 : f32
    %13 = vector.broadcast %cst_11 : f32 to vector<10x8xf32>
    %14 = arith.maximumf %12, %13 : vector<10x8xf32>
    %c0_12 = arith.constant 0 : index
    %c0_13 = arith.constant 0 : index
    %15 = vector.load %arg6[%c0_12, %c0_13] : memref<10x1xf32, #tpu.memory_space<vmem>>, vector<10x1xf32>
    %16 = vector.broadcast %15 : vector<10x1xf32> to vector<10x8xf32>
    %17 = arith.mulf %16, %14 : vector<10x8xf32>
    %cst_14 = arith.constant dense<0.000000e+00> : vector<8xf32>
    %18 = vector.multi_reduction <add>, %17, %cst_14 [0] : vector<10x8xf32> to vector<8xf32>
    %19 = vector.shape_cast %18 : vector<8xf32> to vector<1x8xf32>
    %c0_15 = arith.constant 0 : index
    %c0_16 = arith.constant 0 : index
    %20 = vector.load %arg7[%c0_15, %c0_16] : memref<1x1xf32, #tpu.memory_space<vmem>>, vector<1x1xf32>
    %21 = vector.broadcast %20 : vector<1x1xf32> to vector<1x8xf32>
    %22 = arith.addf %19, %21 : vector<1x8xf32>
    %c0_17 = arith.constant 0 : index
    %c0_18 = arith.constant 0 : index
    %23 = vector.load %arg8[%c0_17, %c0_18] : memref<1x8xf32, #tpu.memory_space<vmem>>, vector<1x8xf32>
    tpu.vector_store %arg8[%c0_17, %c0_18], %22 {strides = array<i32>} : memref<1x8xf32, #tpu.memory_space<vmem>>, vector<1x8xf32>,
    return
  }
  func.func @transform_0(%arg0: i32) -> (i32, i32) {
    %c0_i32 = arith.constant 0 : i32
    %c0_i32_0 = arith.constant 0 : i32
    return %c0_i32, %arg0 : i32, i32
  }
  func.func @transform_1(%arg0: i32) -> (i32, i32) {
    %c0_i32 = arith.constant 0 : i32
    %c0_i32_0 = arith.constant 0 : i32
    %c0_i32_1 = arith.constant 0 : i32
    return %c0_i32, %c0_i32_0 : i32, i32
  }
  func.func @transform_2(%arg0: i32) -> (i32, i32) {
    %c0_i32 = arith.constant 0 : i32
    %c0_i32_0 = arith.constant 0 : i32
    %c0_i32_1 = arith.constant 0 : i32
    return %c0_i32, %c0_i32_0 : i32, i32
  }
  func.func @transform_3(%arg0: i32) -> (i32, i32) {
    %c0_i32 = arith.constant 0 : i32
    %c0_i32_0 = arith.constant 0 : i32
    %c0_i32_1 = arith.constant 0 : i32
    return %c0_i32, %c0_i32_0 : i32, i32
  }
  func.func @transform_4(%arg0: i32) -> (i32, i32) {
    %c0_i32 = arith.constant 0 : i32
    %c0_i32_0 = arith.constant 0 : i32
    %c0_i32_1 = arith.constant 0 : i32
    return %c0_i32, %c0_i32_0 : i32, i32
  }
  func.func @transform_5(%arg0: i32) -> (i32, i32) {
    %c0_i32 = arith.constant 0 : i32
    %c0_i32_0 = arith.constant 0 : i32
    %c0_i32_1 = arith.constant 0 : i32
    return %c0_i32, %c0_i32_0 : i32, i32
  }
  func.func @transform_6(%arg0: i32) -> (i32, i32) {
    %c0_i32 = arith.constant 0 : i32
    %c0_i32_0 = arith.constant 0 : i32
    %c0_i32_1 = arith.constant 0 : i32
    return %c0_i32, %c0_i32_0 : i32, i32
  }
  func.func @transform_7(%arg0: i32) -> (i32, i32) {
    %c0_i32 = arith.constant 0 : i32
    %c0_i32_0 = arith.constant 0 : i32
    return %c0_i32, %arg0 : i32, i32
  }
}

</mosaic_0001>

<llo_original>
// kernel: prunable_nn_forward.1
$region0: #{prunable_nn_forward.1}
  #allocation0 [shape = 'u32[]', space=smem, size = 0x4, offset = 0x4, fixed_abs, tag = 'smem constant byte address 0x4 - core index']
  #allocation1 [shape = 'u32[144,128]{1,0:T(1,128)}', space=vmem, size = 0x12000, scoped, tag = 'internal scratch']
  #allocation2 [shape = 'f32[1,1]{1,0:T(1,128)S(1)}', space=vmem, size = 0x200, scoped, tag = 'scoped memory for prunable_nn_forward.1']
  %s0 = inlined_call_operand.vmem [shape: f32[10,8], index: 0, kind: input, shape index: {}]
  %s1 = inlined_call_operand.vmem [shape: f32[20,10], index: 1, kind: input, shape index: {}]
  %s2 = inlined_call_operand.vmem [shape: f32[20,1], index: 2, kind: input, shape index: {}]
  %s3 = inlined_call_operand.vmem [shape: f32[10,20], index: 3, kind: input, shape index: {}]
  %s4 = inlined_call_operand.vmem [shape: f32[10,1], index: 4, kind: input, shape index: {}]
  %s5 = inlined_call_operand.vmem [shape: f32[10,1], index: 5, kind: input, shape index: {}]
  %s6 = inlined_call_operand.<no memory space> [shape: f32[1,1], index: 6, kind: input, shape index: {}]
  %s7 = inlined_call_operand.hbm [shape: f32[1,8], index: 7, kind: output, shape index: {}]
  %s8 = sld [smem:[#allocation0]]
  $region38: #{prunable_nn_forward.1} parent=0
    _
  %s10 = ssub.s32 1, %s8
  %s11 = scalar_select 0, %s10, %s8
  %v12 = vstv %s6
  %13 = vst [vmem:[#allocation2] sm:$0x1] %v12
  $region1: #{prunable_nn_forward.1} parent=0
    #allocation3 [shape = 'u8[512]{0}', space=vmem, size = 0x400, scoped, tag = 'output window, operand 0, single buffered']
    #allocation4 [shape = 's32[1]{0}', space=sflag, size = 0x4, scoped, tag = 'scoped memory for prunable_nn_forward.1']
    %14 = vsyncpa [#allocation4], 0
    // Predicated region
    $region2: #{prunable_nn_forward.1} parent=1 // pred_check
      _
    $region3: #{prunable_nn_forward.1} parent=1 // pred_check_branch
      %16 = sbr.rel (0) target = $region5
    $region4: #{prunable_nn_forward.1} parent=1 // pred_region
      _
    $region5: #{prunable_nn_forward.1} parent=1 // pred_fallthru
      _
    // Predicated region
    $region6: #{prunable_nn_forward.1} parent=1 // pred_check
      _
    $region7: #{prunable_nn_forward.1} parent=1 // pred_check_branch
      %18 = sbr.rel (0) target = $region9
    $region8: #{prunable_nn_forward.1} parent=1 // pred_region
      _
    $region9: #{prunable_nn_forward.1} parent=1 // pred_fallthru
      _
    // Predicated region
    $region10: #{prunable_nn_forward.1} parent=1 // pred_check
      _
    $region11: #{prunable_nn_forward.1} parent=1 // pred_check_branch
      %20 = sbr.rel (0) target = $region13
    $region12: #{prunable_nn_forward.1} parent=1 // pred_region
      _
    $region13: #{prunable_nn_forward.1} parent=1 // pred_fallthru
      _
    // Predicated region
    $region14: #{prunable_nn_forward.1} parent=1 // pred_check
      _
    $region15: #{prunable_nn_forward.1} parent=1 // pred_check_branch
      %22 = sbr.rel (0) target = $region17
    $region16: #{prunable_nn_forward.1} parent=1 // pred_region
      _
    $region17: #{prunable_nn_forward.1} parent=1 // pred_fallthru
      _
    // Predicated region
    $region18: #{prunable_nn_forward.1} parent=1 // pred_check
      _
    $region19: #{prunable_nn_forward.1} parent=1 // pred_check_branch
      %24 = sbr.rel (0) target = $region21
    $region20: #{prunable_nn_forward.1} parent=1 // pred_region
      _
    $region21: #{prunable_nn_forward.1} parent=1 // pred_fallthru
      _
    // Predicated region
    $region22: #{prunable_nn_forward.1} parent=1 // pred_check
      _
    $region23: #{prunable_nn_forward.1} parent=1 // pred_check_branch
      %26 = sbr.rel (0) target = $region25
    $region24: #{prunable_nn_forward.1} parent=1 // pred_region
      _
    $region25: #{prunable_nn_forward.1} parent=1 // pred_fallthru
      _
    // Predicated region
    $region26: #{prunable_nn_forward.1} parent=1 // pred_check
      _
    $region27: #{prunable_nn_forward.1} parent=1 // pred_check_branch
      %28 = sbr.rel (0) target = $region29
    $region28: #{prunable_nn_forward.1} parent=1 // pred_region
      _
    $region29: #{prunable_nn_forward.1} parent=1 // pred_fallthru
      _
    %v29 = vld [vmem:[%s0] sm:$0xff]
    %v30 = vld [vmem:[%s0 + $0x8] sm:$0x3]
    %v31 = vld [vmem:[%s1] sm:$0xff]
    %v32 = vld [vmem:[%s1 + $0x8] sm:$0xff]
    %v33 = vld [vmem:[%s1 + $0x10] sm:$0xf]
    %v34 = vld [vmem:[%s2] sm:$0xff]
    %v35 = vld [vmem:[%s2 + $0x8] sm:$0xff]
    %v36 = vld [vmem:[%s2 + $0x10] sm:$0xf]
    %38 = vset.pattern.permute.xlu0 0
    %39 = vperm.xlu0 %38, %v34
    %v40 = vpop.permute.xlu0 %39
    %43 = vset.pattern.permute.xlu0 0
    %44 = vperm.xlu0 %43, %v35
    %v45 = vpop.permute.xlu0 %44
    %48 = vset.pattern.permute.xlu0 0
    %49 = vperm.xlu0 %48, %v36
    %v50 = vpop.permute.xlu0 %49
    %vm52 = vcmask 80896
    %v54 = vsel %vm52, %v31, 0
    %v57 = vsel %vm52, %v32, 0
    %v60 = vsel %vm52, %v33, 0
    %vm62 = vcmask 1041408
    %v64 = vsel %vm62, %v30, 0
    %66 = vmatprep.subr.mxu0 0.0
    %67 = vmatpush1.msra.mxu0 0.0
    %68 = vmatprep.subr.mxu0 0.0
    %69 = vmatpush1.msra.mxu0 0.0
    %70 = vmatprep.subr.mxu0 0.0
    %71 = vmatpush1.msra.mxu0 0.0
    %72 = vmatprep.subr.mxu0 0.0
    %73 = vmatpush1.msra.mxu0 0.0
    %74 = vmatprep.subr.mxu0 0.0
    %75 = vmatpush1.msra.mxu0 0.0
    %76 = vmatprep.subr.mxu0 0.0
    %77 = vmatpush1.msra.mxu0 0.0
    %78 = vmatprep.subr.mxu0 0.0
    %79 = vmatpush1.msra.mxu0 0.0
    %80 = vmatprep.subr.mxu0 0.0
    %81 = vmatpush1.msra.mxu0 0.0
    %82 = vmatprep.subr.mxu0 0.0
    %83 = vmatpush1.msra.mxu0 0.0
    %84 = vmatprep.subr.mxu0 0.0
    %85 = vmatpush1.msra.mxu0 0.0
    %86 = vmatprep.subr.mxu0 0.0
    %87 = vmatpush1.msra.mxu0 0.0
    %88 = vmatprep.subr.mxu0 0.0
    %89 = vmatpush1.msra.mxu0 0.0
    %90 = vmatprep.subr.mxu0 0.0
    %91 = vmatpush1.msra.mxu0 0.0
    %92 = vmatprep.subr.mxu0 0.0
    %93 = vmatpush1.msra.mxu0 0.0
    %94 = vmatprep.subr.mxu0 0.0
    %95 = vmatpush1.msra.mxu0 %v64
    %96 = vmatprep.subr.mxu0 0.0
    %97 = vmatpush1.msra.mxu0 %v29
    %98 = vmatprep.subr.mxu0 0.0
    %99 = vmatpush2.msra.mxu0 0.0
    %100 = vmatprep.subr.mxu0 0.0
    %101 = vmatpush2.msra.mxu0 0.0
    %102 = vmatprep.subr.mxu0 0.0
    %103 = vmatpush2.msra.mxu0 0.0
    %104 = vmatprep.subr.mxu0 0.0
    %105 = vmatpush2.msra.mxu0 0.0
    %106 = vmatprep.subr.mxu0 0.0
    %107 = vmatpush2.msra.mxu0 0.0
    %108 = vmatprep.subr.mxu0 0.0
    %109 = vmatpush2.msra.mxu0 0.0
    %110 = vmatprep.subr.mxu0 0.0
    %111 = vmatpush2.msra.mxu0 0.0
    %112 = vmatprep.subr.mxu0 0.0
    %113 = vmatpush2.msra.mxu0 0.0
    %114 = vmatprep.subr.mxu0 0.0
    %115 = vmatpush2.msra.mxu0 0.0
    %116 = vmatprep.subr.mxu0 0.0
    %117 = vmatpush2.msra.mxu0 0.0
    %118 = vmatprep.subr.mxu0 0.0
    %119 = vmatpush2.msra.mxu0 0.0
    %120 = vmatprep.subr.mxu0 0.0
    %121 = vmatpush2.msra.mxu0 0.0
    %122 = vmatprep.subr.mxu0 0.0
    %123 = vmatpush2.msra.mxu0 0.0
    %124 = vmatprep.subr.mxu0 0.0
    %125 = vmatpush2.msra.mxu0 0.0
    %126 = vmatprep.subr.mxu0 0.0
    %127 = vmatpush2.msra.mxu0 0.0
    %128 = vmatprep.subr.mxu0 0.0
    %129 = vmatpush2.msra.mxu0 0.0
    %130 = vmatprep.mubr.f32.mxu0 0.0
    %131 = vmatmul.mubr.f32.gmra.mxu0 %v54
    %v132 = vpop.f32.mrf.mxu0
    %v133 = vadd.f32 %v40, %v132
    %v134 = vpop.f32.mrf.mxu0
    %135 = vmatprep.mubr.f32.mxu0 0.0
    %136 = vmatmul.mubr.f32.gmra.mxu0 %v57
    %v137 = vpop.f32.mrf.mxu0
    %v138 = vadd.f32 %v45, %v137
    %v139 = vpop.f32.mrf.mxu0
    %140 = vmatprep.mubr.f32.mxu0 0.0
    %141 = vmatmul.mubr.f32.gmra.mxu0 %v60
    %v142 = vpop.f32.mrf.mxu0
    %v143 = vadd.f32 %v50, %v142
    %v144 = vpop.f32.mrf.mxu0
    %145 = vdwg.mxu0
    %v146 = vmax.f32 %v133, 0.0
    %v147 = vmax.f32 %v138, 0.0
    %v148 = vmax.f32 %v143, 0.0
    %v149 = vld [vmem:[%s3] sm:$0xff]
    %v150 = vld [vmem:[%s3 + $0x8] sm:$0x3]
    %v151 = vld [vmem:[%s4] sm:$0xff]
    %v152 = vld [vmem:[%s4 + $0x8] sm:$0x3]
    %154 = vset.pattern.permute.xlu0 0
    %155 = vperm.xlu0 %154, %v151
    %v156 = vpop.permute.xlu0 %155
    %159 = vset.pattern.permute.xlu0 0
    %160 = vperm.xlu0 %159, %v152
    %v161 = vpop.permute.xlu0 %160
    %vm163 = vcmask 162816
    %v165 = vsel %vm163, %v149, 0
    %v168 = vsel %vm163, %v150, 0
    %vm170 = vcmask 1043456
    %v172 = vsel %vm170, %v148, 0
    %174 = vmatprep.subr.mxu0 0.0
    %175 = vmatpush1.msra.mxu0 0.0
    %176 = vmatprep.subr.mxu0 0.0
    %177 = vmatpush1.msra.mxu0 0.0
    %178 = vmatprep.subr.mxu0 0.0
    %179 = vmatpush1.msra.mxu0 0.0
    %180 = vmatprep.subr.mxu0 0.0
    %181 = vmatpush1.msra.mxu0 0.0
    %182 = vmatprep.subr.mxu0 0.0
    %183 = vmatpush1.msra.mxu0 0.0
    %184 = vmatprep.subr.mxu0 0.0
    %185 = vmatpush1.msra.mxu0 0.0
    %186 = vmatprep.subr.mxu0 0.0
    %187 = vmatpush1.msra.mxu0 0.0
    %188 = vmatprep.subr.mxu0 0.0
    %189 = vmatpush1.msra.mxu0 0.0
    %190 = vmatprep.subr.mxu0 0.0
    %191 = vmatpush1.msra.mxu0 0.0
    %192 = vmatprep.subr.mxu0 0.0
    %193 = vmatpush1.msra.mxu0 0.0
    %194 = vmatprep.subr.mxu0 0.0
    %195 = vmatpush1.msra.mxu0 0.0
    %196 = vmatprep.subr.mxu0 0.0
    %197 = vmatpush1.msra.mxu0 0.0
    %198 = vmatprep.subr.mxu0 0.0
    %199 = vmatpush1.msra.mxu0 0.0
    %200 = vmatprep.subr.mxu0 0.0
    %201 = vmatpush1.msra.mxu0 %v172
    %202 = vmatprep.subr.mxu0 0.0
    %203 = vmatpush1.msra.mxu0 %v147
    %204 = vmatprep.subr.mxu0 0.0
    %205 = vmatpush1.msra.mxu0 %v146
    %206 = vmatprep.subr.mxu0 0.0
    %207 = vmatpush2.msra.mxu0 0.0
    %208 = vmatprep.subr.mxu0 0.0
    %209 = vmatpush2.msra.mxu0 0.0
    %210 = vmatprep.subr.mxu0 0.0
    %211 = vmatpush2.msra.mxu0 0.0
    %212 = vmatprep.subr.mxu0 0.0
    %213 = vmatpush2.msra.mxu0 0.0
    %214 = vmatprep.subr.mxu0 0.0
    %215 = vmatpush2.msra.mxu0 0.0
    %216 = vmatprep.subr.mxu0 0.0
    %217 = vmatpush2.msra.mxu0 0.0
    %218 = vmatprep.subr.mxu0 0.0
    %219 = vmatpush2.msra.mxu0 0.0
    %220 = vmatprep.subr.mxu0 0.0
    %221 = vmatpush2.msra.mxu0 0.0
    %222 = vmatprep.subr.mxu0 0.0
    %223 = vmatpush2.msra.mxu0 0.0
    %224 = vmatprep.subr.mxu0 0.0
    %225 = vmatpush2.msra.mxu0 0.0
    %226 = vmatprep.subr.mxu0 0.0
    %227 = vmatpush2.msra.mxu0 0.0
    %228 = vmatprep.subr.mxu0 0.0
    %229 = vmatpush2.msra.mxu0 0.0
    %230 = vmatprep.subr.mxu0 0.0
    %231 = vmatpush2.msra.mxu0 0.0
    %232 = vmatprep.subr.mxu0 0.0
    %233 = vmatpush2.msra.mxu0 0.0
    %234 = vmatprep.subr.mxu0 0.0
    %235 = vmatpush2.msra.mxu0 0.0
    %236 = vmatprep.subr.mxu0 0.0
    %237 = vmatpush2.msra.mxu0 0.0
    %238 = vmatprep.mubr.f32.mxu0 0.0
    %239 = vmatmul.mubr.f32.gmra.mxu0 %v165
    %v240 = vpop.f32.mrf.mxu0
    %v241 = vadd.f32 %v156, %v240
    %v242 = vpop.f32.mrf.mxu0
    %243 = vmatprep.mubr.f32.mxu0 0.0
    %244 = vmatmul.mubr.f32.gmra.mxu0 %v168
    %v245 = vpop.f32.mrf.mxu0
    %v246 = vadd.f32 %v161, %v245
    %v247 = vpop.f32.mrf.mxu0
    %248 = vdwg.mxu0
    %v249 = vmax.f32 %v241, 0.0
    %v250 = vmax.f32 %v246, 0.0
    %v251 = vld [vmem:[%s5] sm:$0xff]
    %v252 = vld [vmem:[%s5 + $0x8] sm:$0x3]
    %254 = vset.pattern.permute.xlu0 0
    %255 = vperm.xlu0 %254, %v251
    %v256 = vpop.permute.xlu0 %255
    %259 = vset.pattern.permute.xlu0 0
    %260 = vperm.xlu0 %259, %v252
    %v261 = vpop.permute.xlu0 %260
    %v263 = vmul.f32 %v256, %v249
    %v264 = vmul.f32 %v261, %v250
    %vm265 = vcmask 64512
    %v266 = vsel %vm265, %v263, 0.0
    %vm267 = vcmask 58368
    %v268 = vsel %vm267, %v264, 0.0
    %v269 = vadd.f32 %v266, %v268
    %v270 = vrot.slane %v269, 4
    %v271 = vadd.f32 %v269, %v270
    %v272 = vrot.slane %v271, 2
    %v273 = vadd.f32 %v271, %v272
    %v274 = vrot.slane %v273, 1
    %v275 = vadd.f32 %v273, %v274
    %v276 = vld [vmem:[#allocation2] sm:$0x1]
    %278 = vset.pattern.permute.xlu0 0
    %279 = vperm.xlu0 %278, %v276
    %v280 = vpop.permute.xlu0 %279
    %v282 = vlaneseq
    %v283 = vshrl.u32 %v282, 7
    %v284 = vsub.s32 0, %v283
    %v285 = vrot.slane %v280, %v284
    %v286 = vadd.f32 %v275, %v285
    %vm287 = vcmask 57344
    %288 = vst.msk [vmem:[#allocation3] sm:$0x1] %vm287, %v286
    // Predicated region
    $region30: #{prunable_nn_forward.1} parent=1 // pred_check
      _
    $region31: #{prunable_nn_forward.1} parent=1 // pred_check_branch
      %290 = sbr.rel (0) target = $region33
    $region32: #{prunable_nn_forward.1} parent=1 // pred_region
      %s292 = ssub.s32 16, 16
      %293 = vsyncadd [#allocation4], %s292
      %s295 = sshll.u32 [#allocation3], 4
      %s296 = int_to_ptr.vmem [resolvable:$true] %s295
      %298 = dma.vmem_to_hbm [thread:$0]  %s296, 16, %s7, [#allocation4]
    $region33: #{prunable_nn_forward.1} parent=1 // pred_fallthru
      _
    // Predicated region
    $region34: #{prunable_nn_forward.1} parent=1 // pred_check
      _
    $region35: #{prunable_nn_forward.1} parent=1 // pred_check_branch
      %300 = sbr.rel (0) target = $region37
    $region36: #{prunable_nn_forward.1} parent=1 // pred_region
      %301 = dma.done [#allocation4], 16
    $region37: #{prunable_nn_forward.1} parent=1 // pred_fallthru
      _
    %302 = vsyncpa [#allocation4], 1

</llo_original>
